<compile_context>
chip_gen: v7x
topology: tpu7x:2x2x1
jax: 0.10.0
libtpu: 0.0.40
codegen_flags: <defaults>
</compile_context>

<pallas_src>
import functools

import jax
import jax.numpy as jnp
from jax.experimental import pallas as pl
from jax.experimental.pallas import tpu as pltpu


def _leaky_relu(v, neg_slope):
    return jnp.where(v >= 0, v, neg_slope * v)


def _temporal_block_kernel(x_ref, w1_ref, b1_ref, w2_ref, b2_ref, o_ref,
                           xpad_ref, *, pad, k, dil, neg_slope):
    """One batch element per grid step.

    x_ref    : (1, C, L)    input block
    w*_ref   : (K, C, C)    weights, tap-major so each tap is a contiguous
                            (Cout, Cin) matrix
    b*_ref   : (C, 1)       biases (broadcast along lanes)
    o_ref    : (1, C, L)    output block
    xpad_ref : (C, L+pad)   f32 VMEM scratch reused for both causal convs
    """
    c, length = x_ref.shape[1], x_ref.shape[2]

    x = x_ref[0].astype(jnp.float32)                         # (C, L)

    # Causal left-pad buffer shared by both convs (prefix is always zero).
    xpad_ref[:, :pad] = jnp.zeros((c, pad), jnp.float32)
    xpad_ref[:, pad:] = x

    # ---- causal conv #1 (chomp folded in) + LeakyReLU --------------------
    acc = jnp.broadcast_to(b1_ref[...].astype(jnp.float32), (c, length))
    for j in range(k):                                       # static unroll
        acc = acc + jnp.dot(w1_ref[j].astype(jnp.float32),
                            xpad_ref[:, j * dil: j * dil + length],
                            preferred_element_type=jnp.float32)
    h1 = _leaky_relu(acc, neg_slope)
    # TODO(synk): nn.Dropout is stochastic in train mode; identity (eval) here.

    # ---- causal conv #2 + residual + LeakyReLU ---------------------------
    # Reuse the same padded scratch: overwrite the tail with h1 (the zero
    # prefix is untouched).  h1 is a fully-materialised value, so the store
    # is correctly ordered after all conv-1 reads.
    xpad_ref[:, pad:] = h1
    acc = jnp.broadcast_to(b2_ref[...].astype(jnp.float32), (c, length)) + x
    for j in range(k):
        acc = acc + jnp.dot(w2_ref[j].astype(jnp.float32),
                            xpad_ref[:, j * dil: j * dil + length],
                            preferred_element_type=jnp.float32)
    o_ref[0] = _leaky_relu(acc, neg_slope).astype(o_ref.dtype)


def temporal_block_forward(x, w1, b1, w2, b2, *, kernel_size, stride,
                           dilation, padding, negative_slope=0.01):
    """Fused TemporalBlock forward (inference; dropout = identity)."""
    assert stride == 1, "TCN TemporalBlock uses stride 1"
    # The residual add in the PyTorch module only shape-checks when the
    # chomped conv output length equals L, i.e. padding == dilation*(K-1).
    assert padding == dilation * (kernel_size - 1), (
        "padding must equal dilation*(kernel_size-1) for the residual add")
    n, cin, length = x.shape
    cout = w1.shape[0]
    assert cin == cout, "out += residual requires n_inputs == n_outputs"
    assert length > 0 and padding > 0

    # Re-layout weights: (Cout, Cin, K) -> (K, Cout, Cin) so each tap is a
    # contiguous (Cout, Cin) matrix with Cin on the lane axis.
    w1_t = jnp.transpose(w1, (2, 0, 1))
    w2_t = jnp.transpose(w2, (2, 0, 1))
    b1_2d = b1.reshape(cout, 1)
    b2_2d = b2.reshape(cout, 1)

    kernel = functools.partial(
        _temporal_block_kernel,
        pad=padding, k=kernel_size, dil=dilation, neg_slope=negative_slope)

    # Grid is parallel over batch; each step keeps the padded signal and the
    # intermediate activation entirely in a single VMEM scratch.
    # TODO(synk): for very large (C, L) tile the length axis with a
    # 2*padding-wide recompute halo to bound the VMEM footprint (v7x: 64 MiB).
    return pl.pallas_call(
        kernel,
        out_shape=jax.ShapeDtypeStruct((n, cout, length), x.dtype),
        grid=(n,),
        in_specs=[
            pl.BlockSpec((1, cin, length), lambda i: (i, 0, 0)),
            pl.BlockSpec((kernel_size, cout, cin), lambda i: (0, 0, 0)),
            pl.BlockSpec((cout, 1), lambda i: (0, 0)),
            pl.BlockSpec((kernel_size, cout, cin), lambda i: (0, 0, 0)),
            pl.BlockSpec((cout, 1), lambda i: (0, 0)),
        ],
        out_specs=pl.BlockSpec((1, cout, length), lambda i: (i, 0, 0)),
        scratch_shapes=[pltpu.VMEM((cin, length + padding), jnp.float32)],
        compiler_params=pltpu.CompilerParams(
            dimension_semantics=("parallel",),
        ),
    )(x, w1_t, b1_2d, w2_t, b2_2d)


def _reference_forward(x, w1, b1, w2, b2, *, dilation, padding,
                       negative_slope=0.01):
    """Plain-JAX mirror of PyTorch TemporalBlock.forward (eval mode)."""
    def conv_chomp(inp, w, b):
        y = jax.lax.conv_general_dilated(
            inp, w, window_strides=(1,), padding=[(padding, padding)],
            rhs_dilation=(dilation,),
            dimension_numbers=("NCH", "OIH", "NCH"))
        y = y + b[None, :, None]
        return y[:, :, :-padding]                 # Chomp1d

    h = jax.nn.leaky_relu(conv_chomp(x, w1, b1), negative_slope)
    out = conv_chomp(h, w2, b2) + x               # residual
    return jax.nn.leaky_relu(out, negative_slope)


def _run_case(key, n, c, length, k, dil):
    pad = dil * (k - 1)
    k1, k2, k3, k4, k5 = jax.random.split(key, 5)
    scale = 1.0 / (c * k) ** 0.5
    x = jax.random.normal(k1, (n, c, length), dtype=jnp.float32)
    w1 = jax.random.normal(k2, (c, c, k), dtype=jnp.float32) * scale
    b1 = jax.random.normal(k3, (c,), dtype=jnp.float32) * scale
    w2 = jax.random.normal(k4, (c, c, k), dtype=jnp.float32) * scale
    b2 = jax.random.normal(k5, (c,), dtype=jnp.float32) * scale

    out = temporal_block_forward(
        x, w1, b1, w2, b2, kernel_size=k, stride=1, dilation=dil, padding=pad)
    out = jax.block_until_ready(out)

    ref = _reference_forward(x, w1, b1, w2, b2, dilation=dil, padding=pad)
    assert out.shape == ref.shape, (out.shape, ref.shape)
    assert out.dtype == x.dtype
    err = float(jnp.max(jnp.abs(out - ref)))
    assert jnp.allclose(out, ref, atol=1e-5, rtol=1e-5), err


if __name__ == "__main__":
    root = jax.random.PRNGKey(0)
    key_a, key_b = jax.random.split(root)
    # Small primary case (matches the module's typical tiny-TCN use).
    _run_case(key_a, n=2, c=4, length=16, k=3, dil=2)
    # Slightly larger, lane-friendlier case (L multiple of 128).
    _run_case(key_b, n=3, c=8, length=128, k=3, dil=4)
    print("KERNEL_OK")
</pallas_src>

<mosaic_0001>
module attributes {stable_mosaic.version = 11 : i64} {
  func.func @_temporal_block_kernel(%arg0: i32, %arg1: memref<1x4x16xf32, #tpu.memory_space<vmem>>, %arg2: memref<3x4x4xf32, #tpu.memory_space<vmem>>, %arg3: memref<4x1xf32, #tpu.memory_space<vmem>>, %arg4: memref<3x4x4xf32, #tpu.memory_space<vmem>>, %arg5: memref<4x1xf32, #tpu.memory_space<vmem>>, %arg6: memref<1x4x16xf32, #tpu.memory_space<vmem>>, %arg7: memref<4x20xf32, #tpu.memory_space<vmem>>) attributes {dimension_semantics = [#tpu.dimension_semantics<parallel>], iteration_bounds = array<i64: 2>, scalar_prefetch = 0 : i64, scratch_operands = 1 : i64, tpu.core_type = #tpu.core_type<tc>, window_params = [{transform_indices = @transform_0, window_bounds = array<i64: 1, 4, 16>}, {pipeline_mode = #tpu.pipeline_mode<synchronous>, transform_indices = @transform_1, window_bounds = array<i64: 3, 4, 4>}, {pipeline_mode = #tpu.pipeline_mode<synchronous>, transform_indices = @transform_2, window_bounds = array<i64: 4, 1>}, {pipeline_mode = #tpu.pipeline_mode<synchronous>, transform_indices = @transform_3, window_bounds = array<i64: 3, 4, 4>}, {pipeline_mode = #tpu.pipeline_mode<synchronous>, transform_indices = @transform_4, window_bounds = array<i64: 4, 1>}, {transform_indices = @transform_5, window_bounds = array<i64: 1, 4, 16>}]} {
    %c0 = arith.constant 0 : index
    %c0_0 = arith.constant 0 : index
    %c0_1 = arith.constant 0 : index
    %0 = vector.load %arg1[%c0, %c0_0, %c0_1] : memref<1x4x16xf32, #tpu.memory_space<vmem>>, vector<1x4x16xf32>
    %1 = vector.shape_cast %0 : vector<1x4x16xf32> to vector<4x16xf32>
    %cst = arith.constant 0.000000e+00 : f32
    %2 = vector.broadcast %cst : f32 to vector<4x4xf32>
    %c0_2 = arith.constant 0 : index
    %c0_3 = arith.constant 0 : index
    %3 = vector.load %arg7[%c0_2, %c0_3] : memref<4x20xf32, #tpu.memory_space<vmem>>, vector<4x4xf32>
    tpu.vector_store %arg7[%c0_2, %c0_3], %2 {strides = array<i32>} : memref<4x20xf32, #tpu.memory_space<vmem>>, vector<4x4xf32>,
    %c0_4 = arith.constant 0 : index
    %c4 = arith.constant 4 : index
    %4 = vector.load %arg7[%c0_4, %c4] : memref<4x20xf32, #tpu.memory_space<vmem>>, vector<4x16xf32>
    tpu.vector_store %arg7[%c0_4, %c4], %1 {strides = array<i32>} : memref<4x20xf32, #tpu.memory_space<vmem>>, vector<4x16xf32>,
    %c0_5 = arith.constant 0 : index
    %c0_6 = arith.constant 0 : index
    %5 = vector.load %arg3[%c0_5, %c0_6] : memref<4x1xf32, #tpu.memory_space<vmem>>, vector<4x1xf32>
    %6 = vector.shape_cast %5 : vector<4x1xf32> to vector<4x1xf32>
    %7 = vector.broadcast %6 : vector<4x1xf32> to vector<4x16xf32>
    %c0_7 = arith.constant 0 : index
    %c0_8 = arith.constant 0 : index
    %c0_9 = arith.constant 0 : index
    %8 = vector.load %arg2[%c0_7, %c0_8, %c0_9] : memref<3x4x4xf32, #tpu.memory_space<vmem>>, vector<1x4x4xf32>
    %9 = vector.shape_cast %8 : vector<1x4x4xf32> to vector<4x4xf32>
    %c0_10 = arith.constant 0 : index
    %c0_11 = arith.constant 0 : index
    %10 = vector.load %arg7[%c0_10, %c0_11] : memref<4x20xf32, #tpu.memory_space<vmem>>, vector<4x16xf32>
    %cst_12 = arith.constant dense<0.000000e+00> : vector<4x16xf32>
    %11 = tpu.matmul %9, %10, %cst_12 {dimension_numbers = #tpu.dot_dimension_numbers<[1], [0], [0], [1], [0, 0, 1, 1], [], []>} : vector<4x4xf32>, vector<4x16xf32>, vector<4x16xf32> -> vector<4x16xf32>
    %12 = arith.addf %7, %11 : vector<4x16xf32>
    %c1 = arith.constant 1 : index
    %c0_13 = arith.constant 0 : index
    %c0_14 = arith.constant 0 : index
    %13 = vector.load %arg2[%c1, %c0_13, %c0_14] : memref<3x4x4xf32, #tpu.memory_space<vmem>>, vector<1x4x4xf32>
    %14 = vector.shape_cast %13 : vector<1x4x4xf32> to vector<4x4xf32>
    %c0_15 = arith.constant 0 : index
    %c2 = arith.constant 2 : index
    %15 = vector.load %arg7[%c0_15, %c2] : memref<4x20xf32, #tpu.memory_space<vmem>>, vector<4x16xf32>
    %cst_16 = arith.constant dense<0.000000e+00> : vector<4x16xf32>
    %16 = tpu.matmul %14, %15, %cst_16 {dimension_numbers = #tpu.dot_dimension_numbers<[1], [0], [0], [1], [0, 0, 1, 1], [], []>} : vector<4x4xf32>, vector<4x16xf32>, vector<4x16xf32> -> vector<4x16xf32>
    %17 = arith.addf %12, %16 : vector<4x16xf32>
    %c2_17 = arith.constant 2 : index
    %c0_18 = arith.constant 0 : index
    %c0_19 = arith.constant 0 : index
    %18 = vector.load %arg2[%c2_17, %c0_18, %c0_19] : memref<3x4x4xf32, #tpu.memory_space<vmem>>, vector<1x4x4xf32>
    %19 = vector.shape_cast %18 : vector<1x4x4xf32> to vector<4x4xf32>
    %c0_20 = arith.constant 0 : index
    %c4_21 = arith.constant 4 : index
    %20 = vector.load %arg7[%c0_20, %c4_21] : memref<4x20xf32, #tpu.memory_space<vmem>>, vector<4x16xf32>
    %cst_22 = arith.constant dense<0.000000e+00> : vector<4x16xf32>
    %21 = tpu.matmul %19, %20, %cst_22 {dimension_numbers = #tpu.dot_dimension_numbers<[1], [0], [0], [1], [0, 0, 1, 1], [], []>} : vector<4x4xf32>, vector<4x16xf32>, vector<4x16xf32> -> vector<4x16xf32>
    %22 = arith.addf %17, %21 : vector<4x16xf32>
    %cst_23 = arith.constant 0.000000e+00 : f32
    %23 = vector.broadcast %cst_23 : f32 to vector<4x16xf32>
    %24 = arith.cmpf oge, %22, %23 : vector<4x16xf32>
    %cst_24 = arith.constant 0.00999999977 : f32
    %25 = vector.broadcast %cst_24 : f32 to vector<4x16xf32>
    %26 = arith.mulf %25, %22 : vector<4x16xf32>
    %27 = arith.select %24, %22, %26 : vector<4x16xi1>, vector<4x16xf32>
    %c0_25 = arith.constant 0 : index
    %c4_26 = arith.constant 4 : index
    %28 = vector.load %arg7[%c0_25, %c4_26] : memref<4x20xf32, #tpu.memory_space<vmem>>, vector<4x16xf32>
    tpu.vector_store %arg7[%c0_25, %c4_26], %27 {strides = array<i32>} : memref<4x20xf32, #tpu.memory_space<vmem>>, vector<4x16xf32>,
    %c0_27 = arith.constant 0 : index
    %c0_28 = arith.constant 0 : index
    %29 = vector.load %arg5[%c0_27, %c0_28] : memref<4x1xf32, #tpu.memory_space<vmem>>, vector<4x1xf32>
    %30 = vector.shape_cast %29 : vector<4x1xf32> to vector<4x1xf32>
    %31 = vector.broadcast %30 : vector<4x1xf32> to vector<4x16xf32>
    %32 = arith.addf %31, %1 : vector<4x16xf32>
    %c0_29 = arith.constant 0 : index
    %c0_30 = arith.constant 0 : index
    %c0_31 = arith.constant 0 : index
    %33 = vector.load %arg4[%c0_29, %c0_30, %c0_31] : memref<3x4x4xf32, #tpu.memory_space<vmem>>, vector<1x4x4xf32>
    %34 = vector.shape_cast %33 : vector<1x4x4xf32> to vector<4x4xf32>
    %c0_32 = arith.constant 0 : index
    %c0_33 = arith.constant 0 : index
    %35 = vector.load %arg7[%c0_32, %c0_33] : memref<4x20xf32, #tpu.memory_space<vmem>>, vector<4x16xf32>
    %cst_34 = arith.constant dense<0.000000e+00> : vector<4x16xf32>
    %36 = tpu.matmul %34, %35, %cst_34 {dimension_numbers = #tpu.dot_dimension_numbers<[1], [0], [0], [1], [0, 0, 1, 1], [], []>} : vector<4x4xf32>, vector<4x16xf32>, vector<4x16xf32> -> vector<4x16xf32>
    %37 = arith.addf %32, %36 : vector<4x16xf32>
    %c1_35 = arith.constant 1 : index
    %c0_36 = arith.constant 0 : index
    %c0_37 = arith.constant 0 : index
    %38 = vector.load %arg4[%c1_35, %c0_36, %c0_37] : memref<3x4x4xf32, #tpu.memory_space<vmem>>, vector<1x4x4xf32>
    %39 = vector.shape_cast %38 : vector<1x4x4xf32> to vector<4x4xf32>
    %c0_38 = arith.constant 0 : index
    %c2_39 = arith.constant 2 : index
    %40 = vector.load %arg7[%c0_38, %c2_39] : memref<4x20xf32, #tpu.memory_space<vmem>>, vector<4x16xf32>
    %cst_40 = arith.constant dense<0.000000e+00> : vector<4x16xf32>
    %41 = tpu.matmul %39, %40, %cst_40 {dimension_numbers = #tpu.dot_dimension_numbers<[1], [0], [0], [1], [0, 0, 1, 1], [], []>} : vector<4x4xf32>, vector<4x16xf32>, vector<4x16xf32> -> vector<4x16xf32>
    %42 = arith.addf %37, %41 : vector<4x16xf32>
    %c2_41 = arith.constant 2 : index
    %c0_42 = arith.constant 0 : index
    %c0_43 = arith.constant 0 : index
    %43 = vector.load %arg4[%c2_41, %c0_42, %c0_43] : memref<3x4x4xf32, #tpu.memory_space<vmem>>, vector<1x4x4xf32>
    %44 = vector.shape_cast %43 : vector<1x4x4xf32> to vector<4x4xf32>
    %c0_44 = arith.constant 0 : index
    %c4_45 = arith.constant 4 : index
    %45 = vector.load %arg7[%c0_44, %c4_45] : memref<4x20xf32, #tpu.memory_space<vmem>>, vector<4x16xf32>
    %cst_46 = arith.constant dense<0.000000e+00> : vector<4x16xf32>
    %46 = tpu.matmul %44, %45, %cst_46 {dimension_numbers = #tpu.dot_dimension_numbers<[1], [0], [0], [1], [0, 0, 1, 1], [], []>} : vector<4x4xf32>, vector<4x16xf32>, vector<4x16xf32> -> vector<4x16xf32>
    %47 = arith.addf %42, %46 : vector<4x16xf32>
    %cst_47 = arith.constant 0.000000e+00 : f32
    %48 = vector.broadcast %cst_47 : f32 to vector<4x16xf32>
    %49 = arith.cmpf oge, %47, %48 : vector<4x16xf32>
    %cst_48 = arith.constant 0.00999999977 : f32
    %50 = vector.broadcast %cst_48 : f32 to vector<4x16xf32>
    %51 = arith.mulf %50, %47 : vector<4x16xf32>
    %52 = arith.select %49, %47, %51 : vector<4x16xi1>, vector<4x16xf32>
    %c0_49 = arith.constant 0 : index
    %c0_50 = arith.constant 0 : index
    %c0_51 = arith.constant 0 : index
    %53 = vector.load %arg6[%c0_49, %c0_50, %c0_51] : memref<1x4x16xf32, #tpu.memory_space<vmem>>, vector<1x4x16xf32>
    %54 = vector.shape_cast %53 : vector<1x4x16xf32> to vector<4x16xf32>
    %55 = vector.shape_cast %52 : vector<4x16xf32> to vector<1x4x16xf32>
    tpu.vector_store %arg6[%c0_49, %c0_50, %c0_51], %55 {strides = array<i32>} : memref<1x4x16xf32, #tpu.memory_space<vmem>>, vector<1x4x16xf32>,
    return
  }
  func.func @transform_0(%arg0: i32) -> (i32, i32, i32) {
    %c0_i32 = arith.constant 0 : i32
    %c0_i32_0 = arith.constant 0 : i32
    %c0_i32_1 = arith.constant 0 : i32
    return %arg0, %c0_i32, %c0_i32_0 : i32, i32, i32
  }
  func.func @transform_1(%arg0: i32) -> (i32, i32, i32) {
    %c0_i32 = arith.constant 0 : i32
    %c0_i32_0 = arith.constant 0 : i32
    %c0_i32_1 = arith.constant 0 : i32
    %c0_i32_2 = arith.constant 0 : i32
    return %c0_i32, %c0_i32_0, %c0_i32_1 : i32, i32, i32
  }
  func.func @transform_2(%arg0: i32) -> (i32, i32) {
    %c0_i32 = arith.constant 0 : i32
    %c0_i32_0 = arith.constant 0 : i32
    %c0_i32_1 = arith.constant 0 : i32
    return %c0_i32, %c0_i32_0 : i32, i32
  }
  func.func @transform_3(%arg0: i32) -> (i32, i32, i32) {
    %c0_i32 = arith.constant 0 : i32
    %c0_i32_0 = arith.constant 0 : i32
    %c0_i32_1 = arith.constant 0 : i32
    %c0_i32_2 = arith.constant 0 : i32
    return %c0_i32, %c0_i32_0, %c0_i32_1 : i32, i32, i32
  }
  func.func @transform_4(%arg0: i32) -> (i32, i32) {
    %c0_i32 = arith.constant 0 : i32
    %c0_i32_0 = arith.constant 0 : i32
    %c0_i32_1 = arith.constant 0 : i32
    return %c0_i32, %c0_i32_0 : i32, i32
  }
  func.func @transform_5(%arg0: i32) -> (i32, i32, i32) {
    %c0_i32 = arith.constant 0 : i32
    %c0_i32_0 = arith.constant 0 : i32
    %c0_i32_1 = arith.constant 0 : i32
    return %arg0, %c0_i32, %c0_i32_0 : i32, i32, i32
  }
}

</mosaic_0001>

<llo_original>
// kernel: tpu_custom_call.1
$region0: #{tpu_custom_call.1}
  #allocation0 [shape = 'u32[]', space=smem, size = 0x4, offset = 0x4, fixed_abs, tag = 'smem constant byte address 0x4 - core index']
  #allocation1 [shape = 'u32[144,128]{1,0:T(1,128)}', space=vmem, size = 0x12000, scoped, tag = 'internal scratch']
  #allocation2 [shape = 'f32[4,20]{1,0:T(4,128)}', space=vmem, size = 0x800, scoped, tag = 'scratch operand']
  %s0 = inlined_call_operand.hbm [shape: f32[2,4,16], index: 0, kind: input, shape index: {}]
  %s1 = inlined_call_operand.vmem [shape: f32[3,4,4], index: 1, kind: input, shape index: {}]
  %s2 = inlined_call_operand.vmem [shape: f32[4,1], index: 2, kind: input, shape index: {}]
  %s3 = inlined_call_operand.hbm [shape: f32[3,4,4], index: 3, kind: input, shape index: {}]
  %s4 = inlined_call_operand.vmem [shape: f32[4,1], index: 4, kind: input, shape index: {}]
  %s5 = inlined_call_operand.hbm [shape: f32[2,4,16], index: 5, kind: output, shape index: {}]
  %s6 = sld [smem:[#allocation0]]
  $region61: #{tpu_custom_call.1} parent=0
    _
  %s8 = ssub.s32 1, %s6
  %s9 = scalar_select 0, %s8, %s6
  $region1: #{tpu_custom_call.1} parent=0
    #allocation3 [shape = 'u8[4096]{0}', space=vmem, size = 0x1000, scoped, tag = 'input window, operand 0']
    #allocation4 [shape = 's32[2]{0}', space=sflag, size = 0x8, scoped, tag = 'scoped memory for tpu_custom_call.1']
    #allocation5 [shape = 's32[2]{0}', space=sflag, size = 0x8, scoped, tag = 'scoped memory for tpu_custom_call.1']
    #allocation6 [shape = 'u8[6144]{0}', space=vmem, size = 0x1800, scoped, tag = 'input window, operand 3, single buffered']
    #allocation7 [shape = 's32[1]{0}', space=sflag, size = 0x4, scoped, tag = 'scoped memory for tpu_custom_call.1']
    #allocation8 [shape = 'u8[4096]{0}', space=vmem, size = 0x1000, scoped, tag = 'output window, operand 0']
    %10 = vsyncpa [#allocation4], 0
    %s11 = scalar_lea.sflag [#allocation4], 1
    %12 = vsyncpa %s11, 0
    %13 = vsyncpa [#allocation7], 0
    %14 = vsyncpa [#allocation5], 0
    %s15 = scalar_lea.sflag [#allocation5], 1
    %16 = vsyncpa %s15, 0
    loop: start=0, step=1, limit=4
    $region2: #{tpu_custom_call.1} parent=1 // loop_pre_header
      _
    $region3: #{tpu_custom_call.1} parent=1 // loop_header
      %s18 = sphi 0, %s22
      %p19 = scmp.ge.s32.totalorder %s18, 4
      %s28 = sphi 0, %s30
      %s31 = sphi 0, %s28
      %s32 = sphi 0, %s31
      %s48 = sphi 0, %s32
      %s52 = sphi 0, %s52
      %s54 = sphi 0, %s52
      %s55 = sphi 0, %s54
      %s69 = sphi 0, %s55
      %s73 = sphi 0, %s73
      %s75 = sphi 0, %s73
      %s76 = sphi 0, %s75
      %s90 = sphi 0, %s76
      %s94 = sphi 0, %s94
      %s96 = sphi 0, %s94
      %s97 = sphi 0, %s96
      %s111 = sphi 0, %s97
      %s115 = sphi 0, %s115
      %s117 = sphi 0, %s115
      %s118 = sphi 0, %s117
      %s132 = sphi 0, %s118
      %s138 = sphi 0, %s140
      %s141 = sphi 0, %s138
      %s142 = sphi 0, %s141
      %s158 = sphi 0, %s142
    $region4: #{tpu_custom_call.1} parent=1 // loop_header_branch
      %21 = sbr.rel (%p19) target = $region8
    $region5: #{tpu_custom_call.1} parent=1 // loop_body
      %s23 = ssub.s32 %s18, 1
      %s24 = ssub.s32 %s18, 2
      %s25 = sadd.s32 %s18, 1
      %s26 = ssub.s32 %s18, %s25
      %p27 = scmp.eq.s32.totalorder %s26, 0
      %s29 = sadd.s32 %s28, 1
      %s30 = scalar_select %p27, %s28, %s29
      %p33 = pneg %p27
      %p34 = scmp.eq.s32.totalorder %s18, 1
      %p35 = por %p33, %p34
      %p36 = scmp.ne.s32.totalorder %s28, %s31
      %p37 = scmp.eq.s32.totalorder %s18, 0
      %p38 = por %p36, %p37
      %p39 = scmp.ne.s32.totalorder %s28, %s31
      %p40 = scmp.eq.s32.totalorder %s23, 1
      %p41 = por %p39, %p40
      %p42 = scmp.ne.s32.totalorder %s31, %s32
      %p43 = scmp.eq.s32.totalorder %s23, 0
      %p44 = por %p42, %p43
      %p45 = scmp.ne.s32.totalorder %s31, %s32
      %p46 = scmp.eq.s32.totalorder %s24, 1
      %p47 = por %p45, %p46
      %p49 = scmp.ne.s32.totalorder %s32, %s48
      %p50 = scmp.eq.s32.totalorder %s24, 0
      %p51 = por %p49, %p50
      %s53 = sadd.s32 %s52, 1
      %p56 = scmp.eq.s32.totalorder %s18, 1
      %p57 = scmp.ne.s32.totalorder %s52, %s54
      %p58 = scmp.eq.s32.totalorder %s18, 0
      %p59 = por %p57, %p58
      %p60 = scmp.ne.s32.totalorder %s52, %s54
      %p61 = scmp.eq.s32.totalorder %s23, 1
      %p62 = por %p60, %p61
      %p63 = scmp.ne.s32.totalorder %s54, %s55
      %p64 = scmp.eq.s32.totalorder %s23, 0
      %p65 = por %p63, %p64
      %p66 = scmp.ne.s32.totalorder %s54, %s55
      %p67 = scmp.eq.s32.totalorder %s24, 1
      %p68 = por %p66, %p67
      %p70 = scmp.ne.s32.totalorder %s55, %s69
      %p71 = scmp.eq.s32.totalorder %s24, 0
      %p72 = por %p70, %p71
      %s74 = sadd.s32 %s73, 1
      %p77 = scmp.eq.s32.totalorder %s18, 1
      %p78 = scmp.ne.s32.totalorder %s73, %s75
      %p79 = scmp.eq.s32.totalorder %s18, 0
      %p80 = por %p78, %p79
      %p81 = scmp.ne.s32.totalorder %s73, %s75
      %p82 = scmp.eq.s32.totalorder %s23, 1
      %p83 = por %p81, %p82
      %p84 = scmp.ne.s32.totalorder %s75, %s76
      %p85 = scmp.eq.s32.totalorder %s23, 0
      %p86 = por %p84, %p85
      %p87 = scmp.ne.s32.totalorder %s75, %s76
      %p88 = scmp.eq.s32.totalorder %s24, 1
      %p89 = por %p87, %p88
      %p91 = scmp.ne.s32.totalorder %s76, %s90
      %p92 = scmp.eq.s32.totalorder %s24, 0
      %p93 = por %p91, %p92
      %s95 = sadd.s32 %s94, 1
      %p98 = scmp.eq.s32.totalorder %s18, 1
      %p99 = scmp.ne.s32.totalorder %s94, %s96
      %p100 = scmp.eq.s32.totalorder %s18, 0
      %p101 = por %p99, %p100
      %p102 = scmp.ne.s32.totalorder %s94, %s96
      %p103 = scmp.eq.s32.totalorder %s23, 1
      %p104 = por %p102, %p103
      %p105 = scmp.ne.s32.totalorder %s96, %s97
      %p106 = scmp.eq.s32.totalorder %s23, 0
      %p107 = por %p105, %p106
      %p108 = scmp.ne.s32.totalorder %s96, %s97
      %p109 = scmp.eq.s32.totalorder %s24, 1
      %p110 = por %p108, %p109
      %p112 = scmp.ne.s32.totalorder %s97, %s111
      %p113 = scmp.eq.s32.totalorder %s24, 0
      %p114 = por %p112, %p113
      %s116 = sadd.s32 %s115, 1
      %p119 = scmp.eq.s32.totalorder %s18, 1
      %p120 = scmp.ne.s32.totalorder %s115, %s117
      %p121 = scmp.eq.s32.totalorder %s18, 0
      %p122 = por %p120, %p121
      %p123 = scmp.ne.s32.totalorder %s115, %s117
      %p124 = scmp.eq.s32.totalorder %s23, 1
      %p125 = por %p123, %p124
      %p126 = scmp.ne.s32.totalorder %s117, %s118
      %p127 = scmp.eq.s32.totalorder %s23, 0
      %p128 = por %p126, %p127
      %p129 = scmp.ne.s32.totalorder %s117, %s118
      %p130 = scmp.eq.s32.totalorder %s24, 1
      %p131 = por %p129, %p130
      %p133 = scmp.ne.s32.totalorder %s118, %s132
      %p134 = scmp.eq.s32.totalorder %s24, 0
      %p135 = por %p133, %p134
      %s136 = ssub.s32 %s18, %s25
      %p137 = scmp.eq.s32.totalorder %s136, 0
      %s139 = sadd.s32 %s138, 1
      %s140 = scalar_select %p137, %s138, %s139
      %p143 = pneg %p137
      %p144 = scmp.eq.s32.totalorder %s18, 1
      %p145 = por %p143, %p144
      %p146 = scmp.ne.s32.totalorder %s138, %s141
      %p147 = scmp.eq.s32.totalorder %s18, 0
      %p148 = por %p146, %p147
      %p149 = scmp.ne.s32.totalorder %s138, %s141
      %p150 = scmp.eq.s32.totalorder %s23, 1
      %p151 = por %p149, %p150
      %p152 = scmp.ne.s32.totalorder %s141, %s142
      %p153 = scmp.eq.s32.totalorder %s23, 0
      %p154 = por %p152, %p153
      %p155 = scmp.ne.s32.totalorder %s141, %s142
      %p156 = scmp.eq.s32.totalorder %s24, 1
      %p157 = por %p155, %p156
      %p159 = scmp.ne.s32.totalorder %s142, %s158
      %p160 = scmp.eq.s32.totalorder %s24, 0
      %p161 = por %p159, %p160
      %p162 = scmp.le.s32.totalorder 1, %s18
      %p163 = scmp.lt.s32.totalorder %s18, 3
      %p164 = pnand %p162, %p163
      %p165 = pneg %p164
      // Predicated region
      $region9: #{tpu_custom_call.1} parent=5 // pred_check
        _
      $region10: #{tpu_custom_call.1} parent=5 // pred_check_branch
        %167 = sbr.rel (%p164) target = $region12
      $region11: #{tpu_custom_call.1} parent=5 // pred_region
        %s168 = ssub.s32 %s18, 1
        // Predicated region
        $region13: #{tpu_custom_call.1} parent=11 // pred_check
          %p169 = pneg %p65
        $region14: #{tpu_custom_call.1} parent=11 // pred_check_branch
          %171 = sbr.rel (%p169) target = $region16
        $region15: #{tpu_custom_call.1} parent=11 // pred_region
          _
        $region16: #{tpu_custom_call.1} parent=11 // pred_fallthru
          _
        // Predicated region
        $region17: #{tpu_custom_call.1} parent=11 // pred_check
          %p172 = pneg %p86
        $region18: #{tpu_custom_call.1} parent=11 // pred_check_branch
          %174 = sbr.rel (%p172) target = $region20
        $region19: #{tpu_custom_call.1} parent=11 // pred_region
          _
        $region20: #{tpu_custom_call.1} parent=11 // pred_fallthru
          _
        // Predicated region
        $region21: #{tpu_custom_call.1} parent=11 // pred_check
          %p175 = pneg %p107
        $region22: #{tpu_custom_call.1} parent=11 // pred_check_branch
          %177 = sbr.rel (%p175) target = $region24
        $region23: #{tpu_custom_call.1} parent=11 // pred_region
          %s179 = ssub.s32 192, 192
          %180 = vsyncadd [#allocation7], %s179
          %s181 = sshll.u32 [#allocation6], 4
          %s182 = int_to_ptr.vmem [resolvable:$true] %s181
          %187 = dma.hbm_to_vmem [thread:$0]  %s3, 192, %s182, [#allocation7], 64, 64, 4
        $region24: #{tpu_custom_call.1} parent=11 // pred_fallthru
          _
        // Predicated region
        $region25: #{tpu_custom_call.1} parent=11 // pred_check
          %p188 = pneg %p128
        $region26: #{tpu_custom_call.1} parent=11 // pred_check_branch
          %190 = sbr.rel (%p188) target = $region28
        $region27: #{tpu_custom_call.1} parent=11 // pred_region
          _
        $region28: #{tpu_custom_call.1} parent=11 // pred_fallthru
          _
      $region12: #{tpu_custom_call.1} parent=5 // pred_fallthru
        _
      %p191 = scmp.lt.s32.totalorder %s18, 2
      // Predicated region
      $region29: #{tpu_custom_call.1} parent=5 // pred_check
        %p192 = pneg %p191
      $region30: #{tpu_custom_call.1} parent=5 // pred_check_branch
        %194 = sbr.rel (%p192) target = $region32
      $region31: #{tpu_custom_call.1} parent=5 // pred_region
        // Predicated region
        $region33: #{tpu_custom_call.1} parent=31 // pred_check
          %p195 = pneg %p38
        $region34: #{tpu_custom_call.1} parent=31 // pred_check_branch
          %197 = sbr.rel (%p195) target = $region36
        $region35: #{tpu_custom_call.1} parent=31 // pred_region
          %s198 = sand.u32 %s28, 1
          %s199 = scalar_lea.sflag [#allocation4], %s198
          %s200 = sand.u32 %s28, 1
          %s201 = smul.addr %s200, 4
          %s202 = scalar_lea.vmem [#allocation3], %s201
          %s204 = ssub.s32 64, 64
          %205 = vsyncadd %s199, %s204
          %s206 = smul.addr %s18, 64
          %s207 = scalar_lea.hbm %s0, %s206
          %s209 = sshll.u32 %s202, 4
          %s210 = int_to_ptr.vmem [resolvable:$true] %s209
          %212 = dma.hbm_to_vmem [thread:$0]  %s207, 64, %s210, %s199
        $region36: #{tpu_custom_call.1} parent=31 // pred_fallthru
          _
      $region32: #{tpu_custom_call.1} parent=5 // pred_fallthru
        _
      %p213 = scmp.le.s32.totalorder 1, %s18
      %p214 = scmp.lt.s32.totalorder %s18, 3
      %p215 = pnand %p213, %p214
      %p216 = pneg %p215
      // Predicated region
      $region37: #{tpu_custom_call.1} parent=5 // pred_check
        _
      $region38: #{tpu_custom_call.1} parent=5 // pred_check_branch
        %218 = sbr.rel (%p215) target = $region40
      $region39: #{tpu_custom_call.1} parent=5 // pred_region
        %s219 = ssub.s32 %s18, 1
        %s220 = sand.u32 %s31, 1
        %s221 = scalar_lea.sflag [#allocation4], %s220
        %s222 = sand.u32 %s31, 1
        %s223 = smul.addr %s222, 4
        %s224 = scalar_lea.vmem [#allocation3], %s223
        // Predicated region
        $region41: #{tpu_custom_call.1} parent=39 // pred_check
          %p225 = pneg %p44
        $region42: #{tpu_custom_call.1} parent=39 // pred_check_branch
          %227 = sbr.rel (%p225) target = $region44
        $region43: #{tpu_custom_call.1} parent=39 // pred_region
          %228 = dma.done %s221, 64
        $region44: #{tpu_custom_call.1} parent=39 // pred_fallthru
          _
        // Predicated region
        $region45: #{tpu_custom_call.1} parent=39 // pred_check
          %p229 = pneg %p107
        $region46: #{tpu_custom_call.1} parent=39 // pred_check_branch
          %231 = sbr.rel (%p229) target = $region48
        $region47: #{tpu_custom_call.1} parent=39 // pred_region
          %232 = dma.done [#allocation7], 192
        $region48: #{tpu_custom_call.1} parent=39 // pred_fallthru
          _
        %s233 = sand.u32 %s31, 1
        %s234 = scalar_lea.sflag [#allocation4], %s233
        %s235 = sand.u32 %s31, 1
        %s236 = smul.addr %s235, 4
        %s237 = scalar_lea.vmem [#allocation3], %s236
        %p238 = pneg %p44
        %p239 = pneg %p41
        %p240 = pneg %p65
        %p241 = pneg %p62
        %p242 = pneg %p86
        %p243 = pneg %p83
        %p244 = pneg %p107
        %p245 = pneg %p104
        %p246 = pneg %p128
        %p247 = pneg %p125
        %p248 = pneg %p154
        %p249 = pneg %p151
        %s250 = sand.u32 %s141, 1
        %s251 = scalar_lea.sflag [#allocation5], %s250
        %s252 = sand.u32 %s141, 1
        %s253 = smul.addr %s252, 4
        %s254 = scalar_lea.vmem [#allocation8], %s253
        %v255 = vld [vmem:[%s224] sm:$0xf]
        %vm256 = vcmask 27648
        %257 = vst.msk [vmem:[#allocation2] sm:$0xf] %vm256, 0.0
        %259 = vrot.lane.b32.xlu0 %v255, 4
        %v260 = vpop.permute.xlu0 %259
        %vm262 = vcmask 158752
        %263 = vst.msk [vmem:[#allocation2] sm:$0xf] %vm262, %v260
        %v264 = vld [vmem:[%s2] sm:$0xf]
        %266 = vset.pattern.permute.xlu0 0
        %267 = vperm.xlu0 %266, %v264
        %v268 = vpop.permute.xlu0 %267
        %v270 = vld [vmem:[%s1] sm:$0xf]
        %v271 = vld [vmem:[#allocation2] sm:$0xf]
        %vm272 = vcmask 31744
        %v274 = vsel %vm272, %v270, 0
        %vm276 = vcmask 1043456
        %v278 = vsel %vm276, %v271, 0
        %280 = vmatprep.subr.mxu0 0.0
        %281 = vmatpush1.msra.mxu0 %v278
        %282 = vmatprep.subr.mxu0 0.0
        %283 = vmatpush1.msra.mxu0 0.0
        %284 = vmatprep.subr.mxu0 0.0
        %285 = vmatpush1.msra.mxu0 0.0
        %286 = vmatprep.subr.mxu0 0.0
        %287 = vmatpush1.msra.mxu0 0.0
        %288 = vmatprep.subr.mxu0 0.0
        %289 = vmatpush1.msra.mxu0 0.0
        %290 = vmatprep.subr.mxu0 0.0
        %291 = vmatpush1.msra.mxu0 0.0
        %292 = vmatprep.subr.mxu0 0.0
        %293 = vmatpush1.msra.mxu0 0.0
        %294 = vmatprep.subr.mxu0 0.0
        %295 = vmatpush1.msra.mxu0 0.0
        %296 = vmatprep.subr.mxu0 0.0
        %297 = vmatpush1.msra.mxu0 0.0
        %298 = vmatprep.subr.mxu0 0.0
        %299 = vmatpush1.msra.mxu0 0.0
        %300 = vmatprep.subr.mxu0 0.0
        %301 = vmatpush1.msra.mxu0 0.0
        %302 = vmatprep.subr.mxu0 0.0
        %303 = vmatpush1.msra.mxu0 0.0
        %304 = vmatprep.subr.mxu0 0.0
        %305 = vmatpush1.msra.mxu0 0.0
        %306 = vmatprep.subr.mxu0 0.0
        %307 = vmatpush1.msra.mxu0 0.0
        %308 = vmatprep.subr.mxu0 0.0
        %309 = vmatpush1.msra.mxu0 0.0
        %310 = vmatprep.subr.mxu0 0.0
        %311 = vmatpush1.msra.mxu0 0.0
        %312 = vmatprep.subr.mxu0 0.0
        %313 = vmatpush1.msra.mxu0 0.0
        %314 = vmatprep.subr.mxu0 0.0
        %315 = vmatpush1.msra.mxu0 0.0
        %316 = vmatprep.subr.mxu0 0.0
        %317 = vmatpush1.msra.mxu0 0.0
        %318 = vmatprep.subr.mxu0 0.0
        %319 = vmatpush1.msra.mxu0 0.0
        %320 = vmatprep.subr.mxu0 0.0
        %321 = vmatpush1.msra.mxu0 0.0
        %322 = vmatprep.subr.mxu0 0.0
        %323 = vmatpush1.msra.mxu0 0.0
        %324 = vmatprep.subr.mxu0 0.0
        %325 = vmatpush1.msra.mxu0 0.0
        %326 = vmatprep.subr.mxu0 0.0
        %327 = vmatpush1.msra.mxu0 0.0
        %328 = vmatprep.subr.mxu0 0.0
        %329 = vmatpush1.msra.mxu0 0.0
        %330 = vmatprep.subr.mxu0 0.0
        %331 = vmatpush1.msra.mxu0 0.0
        %332 = vmatprep.subr.mxu0 0.0
        %333 = vmatpush1.msra.mxu0 0.0
        %334 = vmatprep.subr.mxu0 0.0
        %335 = vmatpush1.msra.mxu0 0.0
        %336 = vmatprep.subr.mxu0 0.0
        %337 = vmatpush1.msra.mxu0 0.0
        %338 = vmatprep.subr.mxu0 0.0
        %339 = vmatpush1.msra.mxu0 0.0
        %340 = vmatprep.subr.mxu0 0.0
        %341 = vmatpush1.msra.mxu0 0.0
        %342 = vmatprep.subr.mxu0 0.0
        %343 = vmatpush1.msra.mxu0 0.0
        %344 = vmatprep.mubr.f32.mxu0 0.0
        %345 = vmatmul.mubr.f32.gmra.mrb[0].mxu0 %v274
        %v346 = vpop.f32.mrb[0].mxu0
        %v347 = vadd.f32 0.0, %v346
        %v348 = vpop.f32.mrb[0].mxu0
        %349 = vdwg.mxu0
        %v350 = vadd.f32 %v268, %v347
        %s351 = scalar_lea.vmem %s1, 4
        %v352 = vld [vmem:[%s351] sm:$0xf]
        %353 = vrot.lane.b32.xlu0 %v271, 126
        %v354 = vpop.permute.xlu0 %353
        %v356 = vsel %vm272, %v352, 0
        %v358 = vsel %vm276, %v354, 0
        %360 = vmatprep.subr.mxu0 0.0
        %361 = vmatpush1.msra.mxu0 %v358
        %362 = vmatprep.subr.mxu0 0.0
        %363 = vmatpush1.msra.mxu0 0.0
        %364 = vmatprep.subr.mxu0 0.0
        %365 = vmatpush1.msra.mxu0 0.0
        %366 = vmatprep.subr.mxu0 0.0
        %367 = vmatpush1.msra.mxu0 0.0
        %368 = vmatprep.subr.mxu0 0.0
        %369 = vmatpush1.msra.mxu0 0.0
        %370 = vmatprep.subr.mxu0 0.0
        %371 = vmatpush1.msra.mxu0 0.0
        %372 = vmatprep.subr.mxu0 0.0
        %373 = vmatpush1.msra.mxu0 0.0
        %374 = vmatprep.subr.mxu0 0.0
        %375 = vmatpush1.msra.mxu0 0.0
        %376 = vmatprep.subr.mxu0 0.0
        %377 = vmatpush1.msra.mxu0 0.0
        %378 = vmatprep.subr.mxu0 0.0
        %379 = vmatpush1.msra.mxu0 0.0
        %380 = vmatprep.subr.mxu0 0.0
        %381 = vmatpush1.msra.mxu0 0.0
        %382 = vmatprep.subr.mxu0 0.0
        %383 = vmatpush1.msra.mxu0 0.0
        %384 = vmatprep.subr.mxu0 0.0
        %385 = vmatpush1.msra.mxu0 0.0
        %386 = vmatprep.subr.mxu0 0.0
        %387 = vmatpush1.msra.mxu0 0.0
        %388 = vmatprep.subr.mxu0 0.0
        %389 = vmatpush1.msra.mxu0 0.0
        %390 = vmatprep.subr.mxu0 0.0
        %391 = vmatpush1.msra.mxu0 0.0
        %392 = vmatprep.subr.mxu0 0.0
        %393 = vmatpush1.msra.mxu0 0.0
        %394 = vmatprep.subr.mxu0 0.0
        %395 = vmatpush1.msra.mxu0 0.0
        %396 = vmatprep.subr.mxu0 0.0
        %397 = vmatpush1.msra.mxu0 0.0
        %398 = vmatprep.subr.mxu0 0.0
        %399 = vmatpush1.msra.mxu0 0.0
        %400 = vmatprep.subr.mxu0 0.0
        %401 = vmatpush1.msra.mxu0 0.0
        %402 = vmatprep.subr.mxu0 0.0
        %403 = vmatpush1.msra.mxu0 0.0
        %404 = vmatprep.subr.mxu0 0.0
        %405 = vmatpush1.msra.mxu0 0.0
        %406 = vmatprep.subr.mxu0 0.0
        %407 = vmatpush1.msra.mxu0 0.0
        %408 = vmatprep.subr.mxu0 0.0
        %409 = vmatpush1.msra.mxu0 0.0
        %410 = vmatprep.subr.mxu0 0.0
        %411 = vmatpush1.msra.mxu0 0.0
        %412 = vmatprep.subr.mxu0 0.0
        %413 = vmatpush1.msra.mxu0 0.0
        %414 = vmatprep.subr.mxu0 0.0
        %415 = vmatpush1.msra.mxu0 0.0
        %416 = vmatprep.subr.mxu0 0.0
        %417 = vmatpush1.msra.mxu0 0.0
        %418 = vmatprep.subr.mxu0 0.0
        %419 = vmatpush1.msra.mxu0 0.0
        %420 = vmatprep.subr.mxu0 0.0
        %421 = vmatpush1.msra.mxu0 0.0
        %422 = vmatprep.subr.mxu0 0.0
        %423 = vmatpush1.msra.mxu0 0.0
        %424 = vmatprep.mubr.f32.mxu0 0.0
        %425 = vmatmul.mubr.f32.gmra.mrb[0].mxu0 %v356
        %v426 = vpop.f32.mrb[0].mxu0
        %v427 = vadd.f32 0.0, %v426
        %v428 = vpop.f32.mrb[0].mxu0
        %429 = vdwg.mxu0
        %v430 = vadd.f32 %v350, %v427
        %s431 = scalar_lea.vmem %s1, 8
        %v432 = vld [vmem:[%s431] sm:$0xf]
        %433 = vrot.lane.b32.xlu0 %v271, 124
        %v434 = vpop.permute.xlu0 %433
        %v436 = vsel %vm272, %v432, 0
        %v438 = vsel %vm276, %v434, 0
        %440 = vmatprep.subr.mxu0 0.0
        %441 = vmatpush1.msra.mxu0 %v438
        %442 = vmatprep.subr.mxu0 0.0
        %443 = vmatpush1.msra.mxu0 0.0
        %444 = vmatprep.subr.mxu0 0.0
        %445 = vmatpush1.msra.mxu0 0.0
        %446 = vmatprep.subr.mxu0 0.0
        %447 = vmatpush1.msra.mxu0 0.0
        %448 = vmatprep.subr.mxu0 0.0
        %449 = vmatpush1.msra.mxu0 0.0
        %450 = vmatprep.subr.mxu0 0.0
        %451 = vmatpush1.msra.mxu0 0.0
        %452 = vmatprep.subr.mxu0 0.0
        %453 = vmatpush1.msra.mxu0 0.0
        %454 = vmatprep.subr.mxu0 0.0
        %455 = vmatpush1.msra.mxu0 0.0
        %456 = vmatprep.subr.mxu0 0.0
        %457 = vmatpush1.msra.mxu0 0.0
        %458 = vmatprep.subr.mxu0 0.0
        %459 = vmatpush1.msra.mxu0 0.0
        %460 = vmatprep.subr.mxu0 0.0
        %461 = vmatpush1.msra.mxu0 0.0
        %462 = vmatprep.subr.mxu0 0.0
        %463 = vmatpush1.msra.mxu0 0.0
        %464 = vmatprep.subr.mxu0 0.0
        %465 = vmatpush1.msra.mxu0 0.0
        %466 = vmatprep.subr.mxu0 0.0
        %467 = vmatpush1.msra.mxu0 0.0
        %468 = vmatprep.subr.mxu0 0.0
        %469 = vmatpush1.msra.mxu0 0.0
        %470 = vmatprep.subr.mxu0 0.0
        %471 = vmatpush1.msra.mxu0 0.0
        %472 = vmatprep.subr.mxu0 0.0
        %473 = vmatpush1.msra.mxu0 0.0
        %474 = vmatprep.subr.mxu0 0.0
        %475 = vmatpush1.msra.mxu0 0.0
        %476 = vmatprep.subr.mxu0 0.0
        %477 = vmatpush1.msra.mxu0 0.0
        %478 = vmatprep.subr.mxu0 0.0
        %479 = vmatpush1.msra.mxu0 0.0
        %480 = vmatprep.subr.mxu0 0.0
        %481 = vmatpush1.msra.mxu0 0.0
        %482 = vmatprep.subr.mxu0 0.0
        %483 = vmatpush1.msra.mxu0 0.0
        %484 = vmatprep.subr.mxu0 0.0
        %485 = vmatpush1.msra.mxu0 0.0
        %486 = vmatprep.subr.mxu0 0.0
        %487 = vmatpush1.msra.mxu0 0.0
        %488 = vmatprep.subr.mxu0 0.0
        %489 = vmatpush1.msra.mxu0 0.0
        %490 = vmatprep.subr.mxu0 0.0
        %491 = vmatpush1.msra.mxu0 0.0
        %492 = vmatprep.subr.mxu0 0.0
        %493 = vmatpush1.msra.mxu0 0.0
        %494 = vmatprep.subr.mxu0 0.0
        %495 = vmatpush1.msra.mxu0 0.0
        %496 = vmatprep.subr.mxu0 0.0
        %497 = vmatpush1.msra.mxu0 0.0
        %498 = vmatprep.subr.mxu0 0.0
        %499 = vmatpush1.msra.mxu0 0.0
        %500 = vmatprep.subr.mxu0 0.0
        %501 = vmatpush1.msra.mxu0 0.0
        %502 = vmatprep.subr.mxu0 0.0
        %503 = vmatpush1.msra.mxu0 0.0
        %504 = vmatprep.mubr.f32.mxu0 0.0
        %505 = vmatmul.mubr.f32.gmra.mrb[0].mxu0 %v436
        %v506 = vpop.f32.mrb[0].mxu0
        %v507 = vadd.f32 0.0, %v506
        %v508 = vpop.f32.mrb[0].mxu0
        %509 = vdwg.mxu0
        %v510 = vadd.f32 %v430, %v507
        %vm511 = vcmp.ge.f32.partialorder %v510, 0.0
        %v512 = vmul.f32 %v510, 0.01
        %v513 = vsel %vm511, %v510, %v512
        %515 = vrot.lane.b32.xlu0 %v513, 4
        %v516 = vpop.permute.xlu0 %515
        %518 = vst.msk [vmem:[#allocation2] sm:$0xf] %vm262, %v516
        %v519 = vld [vmem:[%s4] sm:$0xf]
        %521 = vset.pattern.permute.xlu0 0
        %522 = vperm.xlu0 %521, %v519
        %v523 = vpop.permute.xlu0 %522
        %v525 = vadd.f32 %v523, %v255
        %v526 = vld [vmem:[#allocation6] sm:$0xf]
        %v527 = vld [vmem:[#allocation2] sm:$0xf]
        %v529 = vsel %vm272, %v526, 0
        %v532 = vsel %vm276, %v527, 0
        %534 = vmatprep.subr.mxu0 0.0
        %535 = vmatpush1.msra.mxu0 %v532
        %536 = vmatprep.subr.mxu0 0.0
        %537 = vmatpush1.msra.mxu0 0.0
        %538 = vmatprep.subr.mxu0 0.0
        %539 = vmatpush1.msra.mxu0 0.0
        %540 = vmatprep.subr.mxu0 0.0
        %541 = vmatpush1.msra.mxu0 0.0
        %542 = vmatprep.subr.mxu0 0.0
        %543 = vmatpush1.msra.mxu0 0.0
        %544 = vmatprep.subr.mxu0 0.0
        %545 = vmatpush1.msra.mxu0 0.0
        %546 = vmatprep.subr.mxu0 0.0
        %547 = vmatpush1.msra.mxu0 0.0
        %548 = vmatprep.subr.mxu0 0.0
        %549 = vmatpush1.msra.mxu0 0.0
        %550 = vmatprep.subr.mxu0 0.0
        %551 = vmatpush1.msra.mxu0 0.0
        %552 = vmatprep.subr.mxu0 0.0
        %553 = vmatpush1.msra.mxu0 0.0
        %554 = vmatprep.subr.mxu0 0.0
        %555 = vmatpush1.msra.mxu0 0.0
        %556 = vmatprep.subr.mxu0 0.0
        %557 = vmatpush1.msra.mxu0 0.0
        %558 = vmatprep.subr.mxu0 0.0
        %559 = vmatpush1.msra.mxu0 0.0
        %560 = vmatprep.subr.mxu0 0.0
        %561 = vmatpush1.msra.mxu0 0.0
        %562 = vmatprep.subr.mxu0 0.0
        %563 = vmatpush1.msra.mxu0 0.0
        %564 = vmatprep.subr.mxu0 0.0
        %565 = vmatpush1.msra.mxu0 0.0
        %566 = vmatprep.subr.mxu0 0.0
        %567 = vmatpush1.msra.mxu0 0.0
        %568 = vmatprep.subr.mxu0 0.0
        %569 = vmatpush1.msra.mxu0 0.0
        %570 = vmatprep.subr.mxu0 0.0
        %571 = vmatpush1.msra.mxu0 0.0
        %572 = vmatprep.subr.mxu0 0.0
        %573 = vmatpush1.msra.mxu0 0.0
        %574 = vmatprep.subr.mxu0 0.0
        %575 = vmatpush1.msra.mxu0 0.0
        %576 = vmatprep.subr.mxu0 0.0
        %577 = vmatpush1.msra.mxu0 0.0
        %578 = vmatprep.subr.mxu0 0.0
        %579 = vmatpush1.msra.mxu0 0.0
        %580 = vmatprep.subr.mxu0 0.0
        %581 = vmatpush1.msra.mxu0 0.0
        %582 = vmatprep.subr.mxu0 0.0
        %583 = vmatpush1.msra.mxu0 0.0
        %584 = vmatprep.subr.mxu0 0.0
        %585 = vmatpush1.msra.mxu0 0.0
        %586 = vmatprep.subr.mxu0 0.0
        %587 = vmatpush1.msra.mxu0 0.0
        %588 = vmatprep.subr.mxu0 0.0
        %589 = vmatpush1.msra.mxu0 0.0
        %590 = vmatprep.subr.mxu0 0.0
        %591 = vmatpush1.msra.mxu0 0.0
        %592 = vmatprep.subr.mxu0 0.0
        %593 = vmatpush1.msra.mxu0 0.0
        %594 = vmatprep.subr.mxu0 0.0
        %595 = vmatpush1.msra.mxu0 0.0
        %596 = vmatprep.subr.mxu0 0.0
        %597 = vmatpush1.msra.mxu0 0.0
        %598 = vmatprep.mubr.f32.mxu0 0.0
        %599 = vmatmul.mubr.f32.gmra.mrb[0].mxu0 %v529
        %v600 = vpop.f32.mrb[0].mxu0
        %v601 = vadd.f32 0.0, %v600
        %v602 = vpop.f32.mrb[0].mxu0
        %603 = vdwg.mxu0
        %v604 = vadd.f32 %v525, %v601
        %s605 = scalar_lea.vmem [#allocation6], 4
        %v606 = vld [vmem:[%s605] sm:$0xf]
        %607 = vrot.lane.b32.xlu0 %v527, 126
        %v608 = vpop.permute.xlu0 %607
        %v610 = vsel %vm272, %v606, 0
        %v612 = vsel %vm276, %v608, 0
        %614 = vmatprep.subr.mxu0 0.0
        %615 = vmatpush1.msra.mxu0 %v612
        %616 = vmatprep.subr.mxu0 0.0
        %617 = vmatpush1.msra.mxu0 0.0
        %618 = vmatprep.subr.mxu0 0.0
        %619 = vmatpush1.msra.mxu0 0.0
        %620 = vmatprep.subr.mxu0 0.0
        %621 = vmatpush1.msra.mxu0 0.0
        %622 = vmatprep.subr.mxu0 0.0
        %623 = vmatpush1.msra.mxu0 0.0
        %624 = vmatprep.subr.mxu0 0.0
        %625 = vmatpush1.msra.mxu0 0.0
        %626 = vmatprep.subr.mxu0 0.0
        %627 = vmatpush1.msra.mxu0 0.0
        %628 = vmatprep.subr.mxu0 0.0
        %629 = vmatpush1.msra.mxu0 0.0
        %630 = vmatprep.subr.mxu0 0.0
        %631 = vmatpush1.msra.mxu0 0.0
        %632 = vmatprep.subr.mxu0 0.0
        %633 = vmatpush1.msra.mxu0 0.0
        %634 = vmatprep.subr.mxu0 0.0
        %635 = vmatpush1.msra.mxu0 0.0
        %636 = vmatprep.subr.mxu0 0.0
        %637 = vmatpush1.msra.mxu0 0.0
        %638 = vmatprep.subr.mxu0 0.0
        %639 = vmatpush1.msra.mxu0 0.0
        %640 = vmatprep.subr.mxu0 0.0
        %641 = vmatpush1.msra.mxu0 0.0
        %642 = vmatprep.subr.mxu0 0.0
        %643 = vmatpush1.msra.mxu0 0.0
        %644 = vmatprep.subr.mxu0 0.0
        %645 = vmatpush1.msra.mxu0 0.0
        %646 = vmatprep.subr.mxu0 0.0
        %647 = vmatpush1.msra.mxu0 0.0
        %648 = vmatprep.subr.mxu0 0.0
        %649 = vmatpush1.msra.mxu0 0.0
        %650 = vmatprep.subr.mxu0 0.0
        %651 = vmatpush1.msra.mxu0 0.0
        %652 = vmatprep.subr.mxu0 0.0
        %653 = vmatpush1.msra.mxu0 0.0
        %654 = vmatprep.subr.mxu0 0.0
        %655 = vmatpush1.msra.mxu0 0.0
        %656 = vmatprep.subr.mxu0 0.0
        %657 = vmatpush1.msra.mxu0 0.0
        %658 = vmatprep.subr.mxu0 0.0
        %659 = vmatpush1.msra.mxu0 0.0
        %660 = vmatprep.subr.mxu0 0.0
        %661 = vmatpush1.msra.mxu0 0.0
        %662 = vmatprep.subr.mxu0 0.0
        %663 = vmatpush1.msra.mxu0 0.0
        %664 = vmatprep.subr.mxu0 0.0
        %665 = vmatpush1.msra.mxu0 0.0
        %666 = vmatprep.subr.mxu0 0.0
        %667 = vmatpush1.msra.mxu0 0.0
        %668 = vmatprep.subr.mxu0 0.0
        %669 = vmatpush1.msra.mxu0 0.0
        %670 = vmatprep.subr.mxu0 0.0
        %671 = vmatpush1.msra.mxu0 0.0
        %672 = vmatprep.subr.mxu0 0.0
        %673 = vmatpush1.msra.mxu0 0.0
        %674 = vmatprep.subr.mxu0 0.0
        %675 = vmatpush1.msra.mxu0 0.0
        %676 = vmatprep.subr.mxu0 0.0
        %677 = vmatpush1.msra.mxu0 0.0
        %678 = vmatprep.mubr.f32.mxu0 0.0
        %679 = vmatmul.mubr.f32.gmra.mrb[0].mxu0 %v610
        %v680 = vpop.f32.mrb[0].mxu0
        %v681 = vadd.f32 0.0, %v680
        %v682 = vpop.f32.mrb[0].mxu0
        %683 = vdwg.mxu0
        %v684 = vadd.f32 %v604, %v681
        %s685 = scalar_lea.vmem [#allocation6], 8
        %v686 = vld [vmem:[%s685] sm:$0xf]
        %687 = vrot.lane.b32.xlu0 %v527, 124
        %v688 = vpop.permute.xlu0 %687
        %v690 = vsel %vm272, %v686, 0
        %v692 = vsel %vm276, %v688, 0
        %694 = vmatprep.subr.mxu0 0.0
        %695 = vmatpush1.msra.mxu0 %v692
        %696 = vmatprep.subr.mxu0 0.0
        %697 = vmatpush1.msra.mxu0 0.0
        %698 = vmatprep.subr.mxu0 0.0
        %699 = vmatpush1.msra.mxu0 0.0
        %700 = vmatprep.subr.mxu0 0.0
        %701 = vmatpush1.msra.mxu0 0.0
        %702 = vmatprep.subr.mxu0 0.0
        %703 = vmatpush1.msra.mxu0 0.0
        %704 = vmatprep.subr.mxu0 0.0
        %705 = vmatpush1.msra.mxu0 0.0
        %706 = vmatprep.subr.mxu0 0.0
        %707 = vmatpush1.msra.mxu0 0.0
        %708 = vmatprep.subr.mxu0 0.0
        %709 = vmatpush1.msra.mxu0 0.0
        %710 = vmatprep.subr.mxu0 0.0
        %711 = vmatpush1.msra.mxu0 0.0
        %712 = vmatprep.subr.mxu0 0.0
        %713 = vmatpush1.msra.mxu0 0.0
        %714 = vmatprep.subr.mxu0 0.0
        %715 = vmatpush1.msra.mxu0 0.0
        %716 = vmatprep.subr.mxu0 0.0
        %717 = vmatpush1.msra.mxu0 0.0
        %718 = vmatprep.subr.mxu0 0.0
        %719 = vmatpush1.msra.mxu0 0.0
        %720 = vmatprep.subr.mxu0 0.0
        %721 = vmatpush1.msra.mxu0 0.0
        %722 = vmatprep.subr.mxu0 0.0
        %723 = vmatpush1.msra.mxu0 0.0
        %724 = vmatprep.subr.mxu0 0.0
        %725 = vmatpush1.msra.mxu0 0.0
        %726 = vmatprep.subr.mxu0 0.0
        %727 = vmatpush1.msra.mxu0 0.0
        %728 = vmatprep.subr.mxu0 0.0
        %729 = vmatpush1.msra.mxu0 0.0
        %730 = vmatprep.subr.mxu0 0.0
        %731 = vmatpush1.msra.mxu0 0.0
        %732 = vmatprep.subr.mxu0 0.0
        %733 = vmatpush1.msra.mxu0 0.0
        %734 = vmatprep.subr.mxu0 0.0
        %735 = vmatpush1.msra.mxu0 0.0
        %736 = vmatprep.subr.mxu0 0.0
        %737 = vmatpush1.msra.mxu0 0.0
        %738 = vmatprep.subr.mxu0 0.0
        %739 = vmatpush1.msra.mxu0 0.0
        %740 = vmatprep.subr.mxu0 0.0
        %741 = vmatpush1.msra.mxu0 0.0
        %742 = vmatprep.subr.mxu0 0.0
        %743 = vmatpush1.msra.mxu0 0.0
        %744 = vmatprep.subr.mxu0 0.0
        %745 = vmatpush1.msra.mxu0 0.0
        %746 = vmatprep.subr.mxu0 0.0
        %747 = vmatpush1.msra.mxu0 0.0
        %748 = vmatprep.subr.mxu0 0.0
        %749 = vmatpush1.msra.mxu0 0.0
        %750 = vmatprep.subr.mxu0 0.0
        %751 = vmatpush1.msra.mxu0 0.0
        %752 = vmatprep.subr.mxu0 0.0
        %753 = vmatpush1.msra.mxu0 0.0
        %754 = vmatprep.subr.mxu0 0.0
        %755 = vmatpush1.msra.mxu0 0.0
        %756 = vmatprep.subr.mxu0 0.0
        %757 = vmatpush1.msra.mxu0 0.0
        %758 = vmatprep.mubr.f32.mxu0 0.0
        %759 = vmatmul.mubr.f32.gmra.mrb[0].mxu0 %v690
        %v760 = vpop.f32.mrb[0].mxu0
        %v761 = vadd.f32 0.0, %v760
        %v762 = vpop.f32.mrb[0].mxu0
        %763 = vdwg.mxu0
        %v764 = vadd.f32 %v684, %v761
        %vm765 = vcmp.ge.f32.partialorder %v764, 0.0
        %v766 = vmul.f32 %v764, 0.01
        %v767 = vsel %vm765, %v764, %v766
        %vm768 = vcmask 125952
        %769 = vst.msk [vmem:[%s254] sm:$0xf] %vm768, %v767
        %s770 = sand.u32 %s141, 1
        %s771 = scalar_lea.sflag [#allocation5], %s770
        %s772 = sand.u32 %s141, 1
        %s773 = smul.addr %s772, 4
        %s774 = scalar_lea.vmem [#allocation8], %s773
        // Predicated region
        $region49: #{tpu_custom_call.1} parent=39 // pred_check
          %p775 = pneg %p151
        $region50: #{tpu_custom_call.1} parent=39 // pred_check_branch
          %777 = sbr.rel (%p775) target = $region52
        $region51: #{tpu_custom_call.1} parent=39 // pred_region
          %s779 = ssub.s32 64, 64
          %780 = vsyncadd %s771, %s779
          %s781 = smul.addr %s23, 64
          %s782 = scalar_lea.hbm %s5, %s781
          %s784 = sshll.u32 %s774, 4
          %s785 = int_to_ptr.vmem [resolvable:$true] %s784
          %787 = dma.vmem_to_hbm [thread:$0]  %s785, 64, %s782, %s771
        $region52: #{tpu_custom_call.1} parent=39 // pred_fallthru
          _
      $region40: #{tpu_custom_call.1} parent=5 // pred_fallthru
        _
      %p788 = scmp.le.s32.totalorder 2, %s18
      // Predicated region
      $region53: #{tpu_custom_call.1} parent=5 // pred_check
        %p789 = pneg %p788
      $region54: #{tpu_custom_call.1} parent=5 // pred_check_branch
        %791 = sbr.rel (%p789) target = $region56
      $region55: #{tpu_custom_call.1} parent=5 // pred_region
        %s792 = ssub.s32 %s18, 2
        // Predicated region
        $region57: #{tpu_custom_call.1} parent=55 // pred_check
          %p793 = pneg %p157
        $region58: #{tpu_custom_call.1} parent=55 // pred_check_branch
          %795 = sbr.rel (%p793) target = $region60
        $region59: #{tpu_custom_call.1} parent=55 // pred_region
          %s796 = sand.u32 %s142, 1
          %s797 = scalar_lea.sflag [#allocation5], %s796
          %s798 = sand.u32 %s142, 1
          %s799 = smul.addr %s798, 4
          %s800 = scalar_lea.vmem [#allocation8], %s799
          %801 = dma.done %s797, 64
        $region60: #{tpu_custom_call.1} parent=55 // pred_fallthru
          _
      $region56: #{tpu_custom_call.1} parent=5 // pred_fallthru
        _
    $region6: #{tpu_custom_call.1} parent=1 // loop_footer
      %s22 = sadd.s32 1, %s18
    $region7: #{tpu_custom_call.1} parent=1 // loop_footer_branch
      %17 = sbr.rel target = $region3
    $region8: #{tpu_custom_call.1} parent=1 // loop_exit
      _
    %802 = vsyncpa [#allocation4], 1
    %s803 = scalar_lea.sflag [#allocation4], 1
    %804 = vsyncpa %s803, 1
    %805 = vsyncpa [#allocation7], 1
    %806 = vsyncpa [#allocation5], 1
    %s807 = scalar_lea.sflag [#allocation5], 1
    %808 = vsyncpa %s807, 1

</llo_original>
